<compile_context>
chip_gen: v6e
topology: v6e:2x2x1
jax: 0.10.0
libtpu: 0.0.40
codegen_flags: <defaults>
</compile_context>

<pallas_src>
import functools
import numpy as np
import jax
import jax.numpy as jnp
from jax.experimental import pallas as pl
from jax.experimental.pallas import tpu as pltpu


def _round_up(x, m):
    return (x + m - 1) // m * m


def _offsets(length):
    # offset_cache[level] = start of level `level` in the flat (reference) chart
    return [lvl * length - lvl * (lvl - 1) // 2 for lvl in range(length)]


def _srow(level, n):
    # packed score-row index for (level, split n); levels start at 1
    return level * (level - 1) // 2 + n


def _tree_max(vals):
    vals = list(vals)
    while len(vals) > 1:
        nxt = [jnp.maximum(vals[i], vals[i + 1]) for i in range(0, len(vals) - 1, 2)]
        if len(vals) % 2:
            nxt.append(vals[-1])
        vals = nxt
    return vals[0]


@functools.lru_cache(maxsize=None)
def _probe_roll_direction(lane):
    """Cached one-off probe: returns f(k) -> static `shift` such that
    pltpu.roll(row, shift=f(k), axis=1)[..., p] == row[..., p + k]
    (a "left" lane rotation by k).  Two elements are checked so an unexpected
    roll convention raises instead of silently corrupting the DP."""
    def probe(x_ref, o_ref):
        o_ref[...] = pltpu.roll(x_ref[...], shift=lane - 1, axis=1)

    x = jnp.broadcast_to(jnp.arange(lane, dtype=jnp.float32)[None, :], (8, lane))
    y = np.asarray(pl.pallas_call(
        probe, out_shape=jax.ShapeDtypeStruct((8, lane), jnp.float32))(x))
    if y[0, 0] == 1.0 and y[0, 1] == 2.0:            # np.roll convention
        return lambda k: (lane - k) % lane
    if y[0, 0] == float(lane - 1) and y[0, 1] == 0.0:  # opposite convention
        return lambda k: k % lane
    raise RuntimeError("unexpected pltpu.roll lane-rotation convention")


def _make_kernel(length, bt, lane, margin, left_shift, vreg_chart):
    def epilogue(croot, proot, out_ref):
        constr_s = croot[:, 0:1]      # lane 0 = root cell; -subtract already folded in
        pred_s = proot[:, 0:1]
        diff = pred_s - constr_s
        mask = jnp.where(jnp.abs(diff) < 0.001, 0.0, 1.0).astype(jnp.float32)
        hinge = (jnp.maximum(margin + diff, 0.0) * mask).astype(jnp.float32)
        out_ref[0] = jnp.concatenate([hinge, mask], axis=1)   # (bt,2): [:,0]=hinge [:,1]=mask

    if vreg_chart:
        # Both CKY charts live entirely in vregs (Python-list loop carry); each
        # packed score row is loaded once and shared by both charts.
        def kernel(scores_ref, init_ref, out_ref):
            # scores_ref: (1, nrows, bt, lane)   init_ref: (1, length, bt, lane)
            zero = jnp.zeros((bt, lane), jnp.float32)
            constr = [zero]   # level-0 row: all leaf cells are 0
            pred = [zero]
            for level in range(1, length):
                c_cands, p_cands = [], []
                for n in range(level):
                    s = scores_ref[0, _srow(level, n)]          # (bt, lane), single load
                    shift = left_shift(n + 1)                   # lane p -> p + n + 1
                    c_cands.append(constr[n]
                                   + pltpu.roll(constr[level - 1 - n], shift=shift, axis=1)
                                   + s)
                    p_cands.append(pred[n]
                                   + pltpu.roll(pred[level - 1 - n], shift=shift, axis=1)
                                   + s)
                # Invariant: lanes >= length-level hold junk (incl. rolled-in
                # constraint boosts) but are never read back into valid lanes.
                constr.append(_tree_max(c_cands) + init_ref[0, level])
                pred.append(_tree_max(p_cands))
            epilogue(constr[length - 1], pred[length - 1], out_ref)

        return kernel

    # Fallback for long sentences: charts live in VMEM scratch (two separate
    # charts so the shared score row is still DMA'd and loaded only once).
    def kernel(scores_ref, init_ref, out_ref, cchart_ref, pchart_ref):
        zero = jnp.zeros((bt, lane), jnp.float32)
        cchart_ref[0] = zero
        pchart_ref[0] = zero
        for level in range(1, length):
            c_best = None
            p_best = None
            for n in range(level):
                s = scores_ref[0, _srow(level, n)]
                shift = left_shift(n + 1)
                c_cand = (cchart_ref[n]
                          + pltpu.roll(cchart_ref[level - 1 - n], shift=shift, axis=1) + s)
                p_cand = (pchart_ref[n]
                          + pltpu.roll(pchart_ref[level - 1 - n], shift=shift, axis=1) + s)
                c_best = c_cand if c_best is None else jnp.maximum(c_best, c_cand)
                p_best = p_cand if p_best is None else jnp.maximum(p_best, p_cand)
            cchart_ref[level] = c_best + init_ref[0, level]
            pchart_ref[level] = p_best
        epilogue(cchart_ref[length - 1], pchart_ref[length - 1], out_ref)

    return kernel


def constrained_loss(score_components, constraints, *, batch_size, length, margin):
    lane = _round_up(length, 128)
    nrows = length * (length - 1) // 2

    # Batch padding + tile choice: pad to a multiple of 8 with dummy examples
    # (zero scores, no constraints -> hinge = mask = 0), then pick bt so that
    # ntiles >= 2 (both v7x TensorCores used; BlockSpec has work to pipeline).
    b_pad = max(_round_up(batch_size, 8), 8)
    bt = min(8, b_pad // 2)
    ntiles = b_pad // bt

    # ---- pack split scores ONCE: (B, nrows, lane); row = (level, split n), lane = position
    parts = []
    for lvl in range(1, length):
        L = length - lvl
        s_lvl = jnp.stack(score_components[lvl], axis=1)[..., 0]   # (B, L, N)
        s_lvl = jnp.transpose(s_lvl, (0, 2, 1))                    # (B, N, L)
        parts.append(jnp.pad(s_lvl, ((0, 0), (0, 0), (0, lane - L))))
    scores = jnp.concatenate(parts, axis=1)                        # (B, nrows, lane)
    scores = jnp.pad(scores, ((0, b_pad - batch_size), (0, 0), (0, 0)))
    scores = scores.reshape(ntiles, bt, nrows, lane).transpose(0, 2, 1, 3)  # (T,nrows,bt,lane)

    # ---- constrained-only init chart; `subtract` folded into the root row (host side)
    cinit = np.zeros((b_pad, length, lane), np.float32)
    sub_amt = np.zeros((b_pad,), np.float32)
    if constraints is not None:
        for idx, spans in enumerate(constraints):
            for span in spans:
                level = span[1] - 1
                if level <= 0:
                    continue
                cinit[idx, level, span[0]] = 1000.0
                sub_amt[idx] += 1000.0
    cinit[:, length - 1, 0] -= sub_amt        # tree_score = chart[root] - subtract
    init = cinit.reshape(ntiles, bt, length, lane).transpose(0, 2, 1, 3)   # (T,len,bt,lane)

    # Chart-in-vregs path for short sentences (whole DP state fits in registers).
    chart_vregs = 2 * length * ((bt + 7) // 8)
    vreg_chart = (length <= 16) and (chart_vregs <= 32)

    kernel = _make_kernel(length, bt, lane, float(margin),
                          _probe_roll_direction(lane), vreg_chart)

    scratch_shapes = [] if vreg_chart else [
        pltpu.VMEM((length, bt, lane), jnp.float32),
        pltpu.VMEM((length, bt, lane), jnp.float32),
    ]

    block_bytes = (nrows + length) * bt * lane * 4          # scores + init, per tile
    scratch_bytes = 0 if vreg_chart else 2 * length * bt * lane * 4
    vmem_limit = int(min(64 << 20, max(16 << 20, 4 * block_bytes + 2 * scratch_bytes)))

    out = pl.pallas_call(
        kernel,
        out_shape=jax.ShapeDtypeStruct((ntiles, bt, 2), jnp.float32),
        grid_spec=pltpu.PrefetchScalarGridSpec(
            num_scalar_prefetch=0,
            grid=(ntiles,),
            in_specs=[
                pl.BlockSpec((1, nrows, bt, lane), lambda t: (t, 0, 0, 0)),
                pl.BlockSpec((1, length, bt, lane), lambda t: (t, 0, 0, 0)),
            ],
            out_specs=pl.BlockSpec((1, bt, 2), lambda t: (t, 0, 0)),
            scratch_shapes=scratch_shapes,
        ),
        compiler_params=pltpu.CompilerParams(
            dimension_semantics=("parallel",),
            vmem_limit_bytes=vmem_limit),
    )(scores, jnp.asarray(init))

    hs = jnp.sum(out[..., 0])          # padded/dummy examples contribute exactly 0
    ms = jnp.sum(out[..., 1])
    # guarded mean, matching `if mask.sum() > 0.1: hinge.sum()/mask.sum()`
    return jnp.where(ms > 0.1, hs / jnp.maximum(ms, 0.1), hs)


def reference_loss(score_components, constraints, *, batch_size, length, margin):
    # Pure numpy reference mirroring the PyTorch forward.
    offsets = _offsets(length)
    ncells = length * (length + 1) // 2
    s = {}
    for lvl in range(1, length):
        s[lvl] = np.stack([np.asarray(c) for c in score_components[lvl]], axis=1)[..., 0]

    def init_chart(constr):
        chart = np.zeros((batch_size, ncells), np.float32)
        subtract = np.zeros((batch_size, 1), np.float32)
        if constr is not None:
            for idx, spans in enumerate(constr):
                for span in spans:
                    level = span[1] - 1
                    if level <= 0:
                        continue
                    chart[idx, offsets[level] + span[0]] = 1000.0
                    subtract[idx, 0] += 1000.0
        return chart, subtract

    def cky(chart):
        for level in range(1, length):
            L = length - level
            ps = np.zeros((batch_size, L, level), np.float32)
            for n in range(level):
                lo = offsets[n]
                ro = offsets[level - 1 - n] + n + 1
                ps[:, :, n] = chart[:, lo:lo + L] + chart[:, ro:ro + L] + s[level][:, :, n]
            chart[:, offsets[level]:offsets[level] + L] += ps.max(axis=2)
        return chart[:, ncells - 1:ncells]

    cchart, subtract = init_chart(constraints)
    pchart, _ = init_chart(None)
    constr_s = cky(cchart) - subtract
    pred_s = cky(pchart)
    diff = pred_s - constr_s
    mask = (np.abs(diff) >= 0.001).astype(np.float32)
    hinge = np.maximum(margin + diff, 0.0) * mask
    if mask.sum() > 0.1:
        return float(hinge.sum() / mask.sum())
    return float(hinge.sum())


if __name__ == "__main__":
    def run_case(case_id, B, LEN, MARGIN, constraints):
        key = jax.random.fold_in(jax.random.PRNGKey(0), case_id)
        score_components = {}
        for lvl in range(1, LEN):
            comps = []
            for pos in range(LEN - lvl):
                key, k = jax.random.split(key)
                comps.append(jax.random.normal(k, (B, lvl, 1), dtype=jnp.float32))
            score_components[lvl] = comps

        loss = constrained_loss(score_components, constraints,
                                batch_size=B, length=LEN, margin=MARGIN)
        loss = jax.block_until_ready(loss)
        ref = reference_loss(score_components, constraints,
                             batch_size=B, length=LEN, margin=MARGIN)
        assert np.allclose(float(loss), ref, rtol=1e-4, atol=1e-2), (case_id, float(loss), ref)

    # (position, size) spans per batch element.
    run_case(0, 2, 8, 1.0, [[(0, 3), (2, 2)], [(1, 4)]])
    run_case(1, 3, 10, 1.0, [[(0, 3)], [(2, 4), (5, 3)], []])
    print("KERNEL_OK")
</pallas_src>

<mosaic_0001>
module attributes {stable_mosaic.version = 11 : i64} {
  func.func @probe(%arg0: memref<8x128xf32, #tpu.memory_space<vmem>>, %arg1: memref<8x128xf32, #tpu.memory_space<vmem>>) attributes {dimension_semantics = [], scalar_prefetch = 0 : i64, scratch_operands = 0 : i64, tpu.core_type = #tpu.core_type<tc>} {
    %c0 = arith.constant 0 : index
    %c0_0 = arith.constant 0 : index
    %0 = vector.load %arg0[%c0, %c0_0] : memref<8x128xf32, #tpu.memory_space<vmem>>, vector<8x128xf32>
    %c127_i32 = arith.constant 127 : i32
    %1 = tpu.dynamic_rotate %0 by %c127_i32 dim 1 : vector<8x128xf32>, i32 -> vector<8x128xf32>
    %c0_1 = arith.constant 0 : index
    %c0_2 = arith.constant 0 : index
    %2 = vector.load %arg1[%c0_1, %c0_2] : memref<8x128xf32, #tpu.memory_space<vmem>>, vector<8x128xf32>
    tpu.vector_store %arg1[%c0_1, %c0_2], %1 {strides = array<i32>} : memref<8x128xf32, #tpu.memory_space<vmem>>, vector<8x128xf32>,
    return
  }
}

</mosaic_0001>

<llo_original>
// kernel: tpu_custom_call.1
$region0: #{tpu_custom_call.1}
  #allocation0 [shape = 'u32[]', space=smem, size = 0x4, offset = 0x4, fixed_abs, tag = 'smem constant byte address 0x4 - core index']
  #allocation1 [shape = 'u32[144,128]{1,0:T(1,128)}', space=vmem, size = 0x12000, scoped, tag = 'internal scratch']
  %s0 = inlined_call_operand.hbm [shape: f32[8,128], index: 0, kind: input, shape index: {}]
  %s1 = inlined_call_operand.hbm [shape: f32[8,128], index: 1, kind: output, shape index: {}]
  %s2 = sld [smem:[#allocation0]]
  $region18: #{tpu_custom_call.1} parent=0
    _
  %s4 = ssub.s32 1, %s2
  %s5 = scalar_select 0, %s4, %s2
  $region1: #{tpu_custom_call.1} parent=0
    #allocation2 [shape = 'u8[4096]{0}', space=vmem, size = 0x1000, scoped, tag = 'input window, operand 0, single buffered']
    #allocation3 [shape = 's32[1]{0}', space=sflag, size = 0x4, scoped, tag = 'scoped memory for tpu_custom_call.1']
    #allocation4 [shape = 's32[1]{0}', space=sflag, size = 0x4, scoped, tag = 'scoped memory for tpu_custom_call.1']
    #allocation5 [shape = 'u8[4096]{0}', space=vmem, size = 0x1000, scoped, tag = 'output window, operand 0, single buffered']
    %6 = vsyncpa [#allocation3], 0
    %7 = vsyncpa [#allocation4], 0
    // Predicated region
    $region2: #{tpu_custom_call.1} parent=1 // pred_check
      _
    $region3: #{tpu_custom_call.1} parent=1 // pred_check_branch
      %9 = sbr.rel (0) target = $region5
    $region4: #{tpu_custom_call.1} parent=1 // pred_region
      %s11 = ssub.s32 128, 128
      %12 = vsyncadd [#allocation3], %s11
      %s14 = sshll.u32 [#allocation2], 4
      %s15 = int_to_ptr.vmem [resolvable:$true] %s14
      %17 = dma.hbm_to_vmem [thread:$0]  %s0, 128, %s15, [#allocation3]
    $region5: #{tpu_custom_call.1} parent=1 // pred_fallthru
      _
    // Predicated region
    $region6: #{tpu_custom_call.1} parent=1 // pred_check
      _
    $region7: #{tpu_custom_call.1} parent=1 // pred_check_branch
      %19 = sbr.rel (0) target = $region9
    $region8: #{tpu_custom_call.1} parent=1 // pred_region
      %20 = dma.done [#allocation3], 128
    $region9: #{tpu_custom_call.1} parent=1 // pred_fallthru
      _
    %v21 = vld [vmem:[#allocation2] sm:$0xff]
    %22 = vrot.lane.b32.xlu0 %v21, 127
    %v23 = vpop.permute.xlu0 %22
    %24 = vst [vmem:[#allocation5] sm:$0xff] %v23
    // Predicated region
    $region10: #{tpu_custom_call.1} parent=1 // pred_check
      _
    $region11: #{tpu_custom_call.1} parent=1 // pred_check_branch
      %26 = sbr.rel (0) target = $region13
    $region12: #{tpu_custom_call.1} parent=1 // pred_region
      %s28 = ssub.s32 128, 128
      %29 = vsyncadd [#allocation4], %s28
      %s31 = sshll.u32 [#allocation5], 4
      %s32 = int_to_ptr.vmem [resolvable:$true] %s31
      %34 = dma.vmem_to_hbm [thread:$0]  %s32, 128, %s1, [#allocation4]
    $region13: #{tpu_custom_call.1} parent=1 // pred_fallthru
      _
    // Predicated region
    $region14: #{tpu_custom_call.1} parent=1 // pred_check
      _
    $region15: #{tpu_custom_call.1} parent=1 // pred_check_branch
      %36 = sbr.rel (0) target = $region17
    $region16: #{tpu_custom_call.1} parent=1 // pred_region
      %37 = dma.done [#allocation4], 128
    $region17: #{tpu_custom_call.1} parent=1 // pred_fallthru
      _
    %38 = vsyncpa [#allocation3], 1
    %39 = vsyncpa [#allocation4], 1

</llo_original>
